<compile_context>
chip_gen: v5e
topology: v5e:2x2
jax: 0.10.0
libtpu: 0.0.40
codegen_flags: <defaults>
</compile_context>

<pallas_src>
import functools

import jax
import jax.numpy as jnp
from jax import lax
from jax.experimental import pallas as pl
from jax.experimental.pallas import tpu as pltpu


# ---------------------------------------------------------------------------
# Kernel
# ---------------------------------------------------------------------------
def _mlp_kernel(x_ref, t_ref, wslab_ref, vslab_ref, out_ref, *,
                chunk, n_chunks, act_dtype, mxu_dtype):
    """Fused 6-layer MLP, feature-major; processes the tile in lane chunks."""

    def body(c, carry):
        off = pl.multiple_of(c * chunk, 128)
        x = x_ref[:, pl.ds(off, chunk)]                      # (1, chunk)
        t = t_ref[:, pl.ds(off, chunk)]                      # (1, chunk)

        # Static, aligned slab slices (zero-cost ref views, loaded near use
        # so the weights do not stay live across the whole chunk loop).
        def vec(row, rows):                                  # (rows, 1) f32
            return vslab_ref[pl.ds(row, rows), :]

        def mat(row, col, rows, cols):                       # (rows, cols)
            return wslab_ref[pl.ds(row, rows), pl.ds(col, cols)].astype(mxu_dtype)

        # Layer 1 (2 -> 10): two broadcast FMAs on the VPU, no K=2 matmul.
        w1x, w1t, b1 = vec(0, 10), vec(16, 10), vec(32, 10)
        h = jnp.tanh((w1x * x + w1t * t + b1).astype(act_dtype))        # (10, chunk)

        # Layers 2-5 on the MXU: (out,in) @ (in,chunk), f32 accumulation.
        h = jnp.tanh((jnp.dot(mat(0, 0, 50, 10), h.astype(mxu_dtype),
                              preferred_element_type=jnp.float32)
                      + vec(48, 50)).astype(act_dtype))                 # (50, chunk)
        h = jnp.tanh((jnp.dot(mat(0, 128, 50, 50), h.astype(mxu_dtype),
                              preferred_element_type=jnp.float32)
                      + vec(104, 50)).astype(act_dtype))                # (50, chunk)
        h = jnp.tanh((jnp.dot(mat(0, 256, 50, 50), h.astype(mxu_dtype),
                              preferred_element_type=jnp.float32)
                      + vec(160, 50)).astype(act_dtype))                # (50, chunk)
        h = jnp.tanh((jnp.dot(mat(0, 384, 10, 50), h.astype(mxu_dtype),
                              preferred_element_type=jnp.float32)
                      + vec(216, 10)).astype(act_dtype))                # (10, chunk)

        # Layer 6 (10 -> 1): VPU multiply + sublane reduce (no M=1 matmul).
        w6t, b6 = vec(232, 10), vec(248, 1)
        y = jnp.sum((w6t * h).astype(jnp.float32), axis=0, keepdims=True) + b6
        out_ref[:, pl.ds(off, chunk)] = y.astype(out_ref.dtype)         # (1, chunk)
        return carry

    lax.fori_loop(0, n_chunks, body, 0)


# ---------------------------------------------------------------------------
# Parameter handling
# ---------------------------------------------------------------------------
def init_params(key):
    """PyTorch-style Linear init: U(-1/sqrt(fan_in), 1/sqrt(fan_in)).

    Weights stored (out_features, in_features); biases (out_features,).
    """
    dims = [(2, 10), (10, 50), (50, 50), (50, 50), (50, 10), (10, 1)]
    params = []
    for fan_in, fan_out in dims:
        key, kw, kb = jax.random.split(key, 3)
        bound = float(fan_in) ** -0.5
        w = jax.random.uniform(kw, (fan_out, fan_in), jnp.float32,
                               minval=-bound, maxval=bound)
        b = jax.random.uniform(kb, (fan_out,), jnp.float32,
                               minval=-bound, maxval=bound)
        params.append((w, b))
    return params


def pack_params(params):
    """Pack the 12 tensors into two pre-padded slabs with aligned offsets."""
    norm = [(jnp.asarray(w, jnp.float32), jnp.asarray(b, jnp.float32).reshape(-1))
            for (w, b) in params]
    (w1, b1), (w2, b2), (w3, b3), (w4, b4), (w5, b5), (w6, b6) = norm

    # MXU-weight slab: lane offsets are multiples of 128, rows padded to 56.
    wslab = jnp.zeros((56, 512), jnp.float32)
    wslab = wslab.at[0:50, 0:10].set(w2)        # layer 2: (50, 10)
    wslab = wslab.at[0:50, 128:178].set(w3)     # layer 3: (50, 50)
    wslab = wslab.at[0:50, 256:306].set(w4)     # layer 4: (50, 50)
    wslab = wslab.at[0:10, 384:434].set(w5)     # layer 5: (10, 50)

    # Vector slab: row offsets are multiples of 8.
    vslab = jnp.zeros((256,), jnp.float32)
    vslab = vslab.at[0:10].set(w1[:, 0])        # w1 column for x  -> (10,)
    vslab = vslab.at[16:26].set(w1[:, 1])       # w1 column for t
    vslab = vslab.at[32:42].set(b1)
    vslab = vslab.at[48:98].set(b2)
    vslab = vslab.at[104:154].set(b3)
    vslab = vslab.at[160:210].set(b4)
    vslab = vslab.at[216:226].set(b5)
    vslab = vslab.at[232:242].set(w6[0, :])     # w6 pre-transposed -> (10,)
    vslab = vslab.at[248].set(b6[0])
    return wslab, vslab.reshape(256, 1)


# ---------------------------------------------------------------------------
# Generation-aware tiling / precision
# ---------------------------------------------------------------------------
def _detect_chip():
    """Returns (tensorcores_per_chip, default_precision)."""
    try:
        kind = jax.devices()[0].device_kind.lower()
    except Exception:  # pragma: no cover - non-TPU / interpret fallbacks
        kind = ""
    if "v7" in kind:
        return 2, "bf16"          # 2 TCs; bf16-native VPU/EUP
    if "v6" in kind:
        return 1, "bf16"          # 1 TC; bf16-native VPU/EUP
    if "v5p" in kind:
        return 2, "bf16_mxu"      # megacore; no bf16 VPU/EUP
    if "v5" in kind:              # v5e / v5 lite
        return 1, "bf16_mxu"
    return 1, "f32"


_TILE_CANDIDATES = (8192, 4096, 2048, 1024, 512, 256, 128)


def _pick_tile(n_pad, num_cores):
    """Largest lane-dense tile; grid >= 2 only forced on multi-TC chips."""
    if num_cores > 1:
        for t in _TILE_CANDIDATES:
            if n_pad % t == 0 and (n_pad // t) % num_cores == 0:
                return t
    for t in _TILE_CANDIDATES:
        if n_pad % t == 0:
            return t
    return 128  # unreachable: n_pad is always a multiple of 128


# ---------------------------------------------------------------------------
# Wrapper
# ---------------------------------------------------------------------------
def model_forward(x_row, t_row, packed, *, precision=None, tile_n=None):
    """x_row, t_row: lane-major (1, N) (or (N,)) float32.  Returns (1, N)."""
    wslab, vslab = packed
    n = x_row.shape[-1]
    x_row = jnp.asarray(x_row, jnp.float32).reshape(1, n)
    t_row = jnp.asarray(t_row, jnp.float32).reshape(1, n)

    num_cores, default_prec = _detect_chip()
    if precision is None:
        precision = default_prec
    act_dtype = jnp.bfloat16 if precision == "bf16" else jnp.float32
    mxu_dtype = jnp.bfloat16 if precision in ("bf16", "bf16_mxu") else jnp.float32

    # Pad the batch to a lane multiple (arbitrary collocation counts work).
    n_pad = ((n + 127) // 128) * 128
    if n_pad != n:
        pad = ((0, 0), (0, n_pad - n))
        x_row = jnp.pad(x_row, pad)
        t_row = jnp.pad(t_row, pad)

    if tile_n is None:
        tile_n = _pick_tile(n_pad, num_cores)
    assert n_pad % tile_n == 0, (n_pad, tile_n)
    chunk = min(512, tile_n)          # bound vreg live ranges per inner step
    assert tile_n % chunk == 0
    n_chunks = tile_n // chunk

    kernel = functools.partial(_mlp_kernel, chunk=chunk, n_chunks=n_chunks,
                               act_dtype=act_dtype, mxu_dtype=mxu_dtype)

    row_spec = pl.BlockSpec((1, tile_n), lambda i: (0, i))
    out = pl.pallas_call(
        kernel,
        out_shape=jax.ShapeDtypeStruct((1, n_pad), jnp.float32),
        grid_spec=pltpu.PrefetchScalarGridSpec(
            num_scalar_prefetch=0,
            grid=(n_pad // tile_n,),
            in_specs=[row_spec, row_spec,
                      pl.BlockSpec(wslab.shape, lambda i: (0, 0)),
                      pl.BlockSpec(vslab.shape, lambda i: (0, 0))],
            out_specs=row_spec,
        ),
        compiler_params=pltpu.CompilerParams(
            dimension_semantics=("parallel",)),
    )(x_row, t_row, wslab, vslab)

    if n_pad != n:
        out = out[:, :n]
    return out


def model_forward_ref(x_col, t_col, params):
    """Pure-JAX reference (batch-major, PyTorch semantics)."""
    h = jnp.concatenate([x_col, t_col], axis=1).astype(jnp.float32)
    for idx, (w, b) in enumerate(params):
        h = h @ w.T + b.reshape(1, -1)
        if idx < len(params) - 1:
            h = jnp.tanh(h)
    return h


# ---------------------------------------------------------------------------
if __name__ == "__main__":
    L = 40.0
    N = 256

    key = jax.random.PRNGKey(0)
    key_p, key_t, key_t2 = jax.random.split(key, 3)
    params = init_params(key_p)
    packed = pack_params(params)

    # Lane-major (1, N) inputs: no (N,1)<->(1,N) relayout per forward call.
    x_row = jnp.linspace(-L, L, N, dtype=jnp.float32).reshape(1, N)
    t_row = jax.random.uniform(key_t, (1, N), jnp.float32)

    ref = model_forward_ref(x_row.reshape(N, 1), t_row.reshape(N, 1),
                            params).reshape(1, N)

    # Exact-precision run (matches the fp32 PyTorch forward).
    out_f32 = jax.block_until_ready(
        model_forward(x_row, t_row, packed, precision="f32"))
    assert out_f32.shape == (1, N), out_f32.shape
    assert jnp.allclose(out_f32, ref, atol=1e-4, rtol=1e-4), \
        "f32 kernel mismatch vs reference"

    # Generation-tuned fast run (bf16 MXU / activations where supported).
    out_fast = jax.block_until_ready(model_forward(x_row, t_row, packed))
    assert out_fast.shape == (1, N)
    assert bool(jnp.all(jnp.isfinite(out_fast)))
    assert jnp.allclose(out_fast, ref, atol=1e-1, rtol=1e-1), \
        "fast-precision kernel diverged from reference"

    # Exercise the non-multiple-of-128 padded path once.
    N2 = 300
    x2 = jnp.linspace(-L, L, N2, dtype=jnp.float32).reshape(1, N2)
    t2 = jax.random.uniform(key_t2, (1, N2), jnp.float32)
    out2 = jax.block_until_ready(
        model_forward(x2, t2, packed, precision="f32"))
    ref2 = model_forward_ref(x2.reshape(N2, 1), t2.reshape(N2, 1),
                             params).reshape(1, N2)
    assert jnp.allclose(out2, ref2, atol=1e-4, rtol=1e-4), \
        "padded-path mismatch vs reference"

    print("KERNEL_OK")
</pallas_src>

<mosaic_0001>
module attributes {stable_mosaic.version = 11 : i64} {
  func.func @_mlp_kernel(%arg0: i32, %arg1: memref<1x256xf32, #tpu.memory_space<vmem>>, %arg2: memref<1x256xf32, #tpu.memory_space<vmem>>, %arg3: memref<56x512xf32, #tpu.memory_space<vmem>>, %arg4: memref<256x1xf32, #tpu.memory_space<vmem>>, %arg5: memref<1x256xf32, #tpu.memory_space<vmem>>) attributes {dimension_semantics = [#tpu.dimension_semantics<parallel>], iteration_bounds = array<i64: 1>, scalar_prefetch = 0 : i64, scratch_operands = 0 : i64, tpu.core_type = #tpu.core_type<tc>, window_params = [{transform_indices = @transform_0, window_bounds = array<i64: 1, 256>}, {transform_indices = @transform_1, window_bounds = array<i64: 1, 256>}, {pipeline_mode = #tpu.pipeline_mode<synchronous>, transform_indices = @transform_2, window_bounds = array<i64: 56, 512>}, {pipeline_mode = #tpu.pipeline_mode<synchronous>, transform_indices = @transform_3, window_bounds = array<i64: 256, 1>}, {transform_indices = @transform_4, window_bounds = array<i64: 1, 256>}]} {
    %c0_i32 = arith.constant 0 : i32
    %c256_i32 = arith.constant 256 : i32
    %0 = arith.muli %c0_i32, %c256_i32 : i32
    %1 = tpu.assume_multiple %0, 128 : i32
    %c0 = arith.constant 0 : index
    %2 = arith.index_cast %1 : i32 to index
    %3 = vector.load %arg1[%c0, %2] : memref<1x256xf32, #tpu.memory_space<vmem>>, vector<1x256xf32>
    %c0_0 = arith.constant 0 : index
    %4 = arith.index_cast %1 : i32 to index
    %5 = vector.load %arg2[%c0_0, %4] : memref<1x256xf32, #tpu.memory_space<vmem>>, vector<1x256xf32>
    %c0_1 = arith.constant 0 : index
    %c0_2 = arith.constant 0 : index
    %6 = vector.load %arg4[%c0_1, %c0_2] : memref<256x1xf32, #tpu.memory_space<vmem>>, vector<10x1xf32>
    %c16 = arith.constant 16 : index
    %c0_3 = arith.constant 0 : index
    %7 = vector.load %arg4[%c16, %c0_3] : memref<256x1xf32, #tpu.memory_space<vmem>>, vector<10x1xf32>
    %c32 = arith.constant 32 : index
    %c0_4 = arith.constant 0 : index
    %8 = vector.load %arg4[%c32, %c0_4] : memref<256x1xf32, #tpu.memory_space<vmem>>, vector<10x1xf32>
    %9 = vector.broadcast %6 : vector<10x1xf32> to vector<10x256xf32>
    %10 = vector.broadcast %3 : vector<1x256xf32> to vector<10x256xf32>
    %11 = arith.mulf %9, %10 : vector<10x256xf32>
    %12 = vector.broadcast %7 : vector<10x1xf32> to vector<10x256xf32>
    %13 = vector.broadcast %5 : vector<1x256xf32> to vector<10x256xf32>
    %14 = arith.mulf %12, %13 : vector<10x256xf32>
    %15 = arith.addf %11, %14 : vector<10x256xf32>
    %16 = vector.broadcast %8 : vector<10x1xf32> to vector<10x256xf32>
    %17 = arith.addf %15, %16 : vector<10x256xf32>
    %18 = math.tanh %17 : vector<10x256xf32>
    %c0_5 = arith.constant 0 : index
    %c0_6 = arith.constant 0 : index
    %19 = vector.load %arg3[%c0_5, %c0_6] : memref<56x512xf32, #tpu.memory_space<vmem>>, vector<50x10xf32>
    %cst = arith.constant dense<0.000000e+00> : vector<50x256xf32>
    %20 = tpu.matmul %19, %18, %cst {dimension_numbers = #tpu.dot_dimension_numbers<[1], [0], [0], [1], [0, 0, 1, 1], [], []>} : vector<50x10xf32>, vector<10x256xf32>, vector<50x256xf32> -> vector<50x256xf32>
    %c48 = arith.constant 48 : index
    %c0_7 = arith.constant 0 : index
    %21 = vector.load %arg4[%c48, %c0_7] : memref<256x1xf32, #tpu.memory_space<vmem>>, vector<50x1xf32>
    %22 = vector.broadcast %21 : vector<50x1xf32> to vector<50x256xf32>
    %23 = arith.addf %20, %22 : vector<50x256xf32>
    %24 = math.tanh %23 : vector<50x256xf32>
    %c0_8 = arith.constant 0 : index
    %c128 = arith.constant 128 : index
    %25 = vector.load %arg3[%c0_8, %c128] : memref<56x512xf32, #tpu.memory_space<vmem>>, vector<50x50xf32>
    %cst_9 = arith.constant dense<0.000000e+00> : vector<50x256xf32>
    %26 = tpu.matmul %25, %24, %cst_9 {dimension_numbers = #tpu.dot_dimension_numbers<[1], [0], [0], [1], [0, 0, 1, 1], [], []>} : vector<50x50xf32>, vector<50x256xf32>, vector<50x256xf32> -> vector<50x256xf32>
    %c104 = arith.constant 104 : index
    %c0_10 = arith.constant 0 : index
    %27 = vector.load %arg4[%c104, %c0_10] : memref<256x1xf32, #tpu.memory_space<vmem>>, vector<50x1xf32>
    %28 = vector.broadcast %27 : vector<50x1xf32> to vector<50x256xf32>
    %29 = arith.addf %26, %28 : vector<50x256xf32>
    %30 = math.tanh %29 : vector<50x256xf32>
    %c0_11 = arith.constant 0 : index
    %c256 = arith.constant 256 : index
    %31 = vector.load %arg3[%c0_11, %c256] : memref<56x512xf32, #tpu.memory_space<vmem>>, vector<50x50xf32>
    %cst_12 = arith.constant dense<0.000000e+00> : vector<50x256xf32>
    %32 = tpu.matmul %31, %30, %cst_12 {dimension_numbers = #tpu.dot_dimension_numbers<[1], [0], [0], [1], [0, 0, 1, 1], [], []>} : vector<50x50xf32>, vector<50x256xf32>, vector<50x256xf32> -> vector<50x256xf32>
    %c160 = arith.constant 160 : index
    %c0_13 = arith.constant 0 : index
    %33 = vector.load %arg4[%c160, %c0_13] : memref<256x1xf32, #tpu.memory_space<vmem>>, vector<50x1xf32>
    %34 = vector.broadcast %33 : vector<50x1xf32> to vector<50x256xf32>
    %35 = arith.addf %32, %34 : vector<50x256xf32>
    %36 = math.tanh %35 : vector<50x256xf32>
    %c0_14 = arith.constant 0 : index
    %c384 = arith.constant 384 : index
    %37 = vector.load %arg3[%c0_14, %c384] : memref<56x512xf32, #tpu.memory_space<vmem>>, vector<10x50xf32>
    %cst_15 = arith.constant dense<0.000000e+00> : vector<10x256xf32>
    %38 = tpu.matmul %37, %36, %cst_15 {dimension_numbers = #tpu.dot_dimension_numbers<[1], [0], [0], [1], [0, 0, 1, 1], [], []>} : vector<10x50xf32>, vector<50x256xf32>, vector<10x256xf32> -> vector<10x256xf32>
    %c216 = arith.constant 216 : index
    %c0_16 = arith.constant 0 : index
    %39 = vector.load %arg4[%c216, %c0_16] : memref<256x1xf32, #tpu.memory_space<vmem>>, vector<10x1xf32>
    %40 = vector.broadcast %39 : vector<10x1xf32> to vector<10x256xf32>
    %41 = arith.addf %38, %40 : vector<10x256xf32>
    %42 = math.tanh %41 : vector<10x256xf32>
    %c232 = arith.constant 232 : index
    %c0_17 = arith.constant 0 : index
    %43 = vector.load %arg4[%c232, %c0_17] : memref<256x1xf32, #tpu.memory_space<vmem>>, vector<10x1xf32>
    %c248 = arith.constant 248 : index
    %c0_18 = arith.constant 0 : index
    %44 = vector.load %arg4[%c248, %c0_18] : memref<256x1xf32, #tpu.memory_space<vmem>>, vector<1x1xf32>
    %45 = vector.broadcast %43 : vector<10x1xf32> to vector<10x256xf32>
    %46 = arith.mulf %45, %42 : vector<10x256xf32>
    %cst_19 = arith.constant dense<0.000000e+00> : vector<256xf32>
    %47 = vector.multi_reduction <add>, %46, %cst_19 [0] : vector<10x256xf32> to vector<256xf32>
    %48 = vector.shape_cast %47 : vector<256xf32> to vector<1x256xf32>
    %49 = vector.broadcast %44 : vector<1x1xf32> to vector<1x256xf32>
    %50 = arith.addf %48, %49 : vector<1x256xf32>
    %c0_20 = arith.constant 0 : index
    %51 = arith.index_cast %1 : i32 to index
    %52 = vector.load %arg5[%c0_20, %51] : memref<1x256xf32, #tpu.memory_space<vmem>>, vector<1x256xf32>
    tpu.vector_store %arg5[%c0_20, %51], %50 {strides = array<i32>} : memref<1x256xf32, #tpu.memory_space<vmem>>, vector<1x256xf32>,
    %c1_i32 = arith.constant 1 : i32
    return
  }
  func.func @transform_0(%arg0: i32) -> (i32, i32) {
    %c0_i32 = arith.constant 0 : i32
    %c0_i32_0 = arith.constant 0 : i32
    return %c0_i32, %arg0 : i32, i32
  }
  func.func @transform_1(%arg0: i32) -> (i32, i32) {
    %c0_i32 = arith.constant 0 : i32
    %c0_i32_0 = arith.constant 0 : i32
    return %c0_i32, %arg0 : i32, i32
  }
  func.func @transform_2(%arg0: i32) -> (i32, i32) {
    %c0_i32 = arith.constant 0 : i32
    %c0_i32_0 = arith.constant 0 : i32
    %c0_i32_1 = arith.constant 0 : i32
    return %c0_i32, %c0_i32_0 : i32, i32
  }
  func.func @transform_3(%arg0: i32) -> (i32, i32) {
    %c0_i32 = arith.constant 0 : i32
    %c0_i32_0 = arith.constant 0 : i32
    %c0_i32_1 = arith.constant 0 : i32
    return %c0_i32, %c0_i32_0 : i32, i32
  }
  func.func @transform_4(%arg0: i32) -> (i32, i32) {
    %c0_i32 = arith.constant 0 : i32
    %c0_i32_0 = arith.constant 0 : i32
    return %c0_i32, %arg0 : i32, i32
  }
}

</mosaic_0001>

<llo_original>
// kernel: tpu_custom_call.1
$region0: #{tpu_custom_call.1}
  #allocation0 [shape = 'u32[]', space=smem, size = 0x4, offset = 0x4, fixed_abs, tag = 'smem constant byte address 0x4 - core index']
  #allocation1 [shape = 'u32[72,128]{1,0:T(1,128)}', space=vmem, size = 0x9000, scoped, tag = 'internal scratch']
  %s0 = inlined_call_operand.vmem [shape: f32[1,256], index: 0, kind: input, shape index: {}]
  %s1 = inlined_call_operand.vmem [shape: f32[1,256], index: 1, kind: input, shape index: {}]
  %s2 = inlined_call_operand.vmem [shape: f32[56,512], index: 2, kind: input, shape index: {}]
  %s3 = inlined_call_operand.vmem [shape: f32[256,1], index: 3, kind: input, shape index: {}]
  %s4 = inlined_call_operand.hbm [shape: f32[1,256], index: 4, kind: output, shape index: {}]
  %s5 = sld [smem:[#allocation0]]
  $region26: #{tpu_custom_call.1} parent=0
    _
  %s7 = ssub.s32 1, %s5
  %s8 = scalar_select 0, %s7, %s5
  $region1: #{tpu_custom_call.1} parent=0
    #allocation2 [shape = 'u8[1024]{0}', space=vmem, size = 0x400, scoped, tag = 'output window, operand 0, single buffered']
    #allocation3 [shape = 's32[1]{0}', space=sflag, size = 0x4, scoped, tag = 'scoped memory for tpu_custom_call.1']
    %9 = vsyncpa [#allocation3], 0
    // Predicated region
    $region2: #{tpu_custom_call.1} parent=1 // pred_check
      _
    $region3: #{tpu_custom_call.1} parent=1 // pred_check_branch
      %11 = sbr.rel (0) target = $region5
    $region4: #{tpu_custom_call.1} parent=1 // pred_region
      _
    $region5: #{tpu_custom_call.1} parent=1 // pred_fallthru
      _
    // Predicated region
    $region6: #{tpu_custom_call.1} parent=1 // pred_check
      _
    $region7: #{tpu_custom_call.1} parent=1 // pred_check_branch
      %13 = sbr.rel (0) target = $region9
    $region8: #{tpu_custom_call.1} parent=1 // pred_region
      _
    $region9: #{tpu_custom_call.1} parent=1 // pred_fallthru
      _
    // Predicated region
    $region10: #{tpu_custom_call.1} parent=1 // pred_check
      _
    $region11: #{tpu_custom_call.1} parent=1 // pred_check_branch
      %15 = sbr.rel (0) target = $region13
    $region12: #{tpu_custom_call.1} parent=1 // pred_region
      _
    $region13: #{tpu_custom_call.1} parent=1 // pred_fallthru
      _
    // Predicated region
    $region14: #{tpu_custom_call.1} parent=1 // pred_check
      _
    $region15: #{tpu_custom_call.1} parent=1 // pred_check_branch
      %17 = sbr.rel (0) target = $region17
    $region16: #{tpu_custom_call.1} parent=1 // pred_region
      _
    $region17: #{tpu_custom_call.1} parent=1 // pred_fallthru
      _
    %v18 = vld [vmem:[%s0] sm:$0x3]
    %v19 = vld [vmem:[%s1] sm:$0x3]
    %v20 = vld [vmem:[%s3] sm:$0xff]
    %v21 = vld [vmem:[%s3 + $0x8] sm:$0x3]
    %v22 = vld [vmem:[%s3 + $0x10] sm:$0xff]
    %v23 = vld [vmem:[%s3 + $0x18] sm:$0x3]
    %v24 = vld [vmem:[%s3 + $0x20] sm:$0xff]
    %v25 = vld [vmem:[%s3 + $0x28] sm:$0x3]
    %27 = vset.pattern.permute.xlu0 0
    %28 = vperm.xlu0 %27, %v20
    %v29 = vpop.permute.xlu0 %28
    %32 = vset.pattern.permute.xlu0 0
    %33 = vperm.xlu0 %32, %v21
    %v34 = vpop.permute.xlu0 %33
    %v37 = vperm.slane %v18, 0
    %v38 = vperm.slane %v18, 1
    %v41 = vmul.f32 %v29, %v37
    %v42 = vmul.f32 %v29, %v38
    %v43 = vmul.f32 %v34, %v37
    %v44 = vmul.f32 %v34, %v38
    %46 = vset.pattern.permute.xlu0 0
    %47 = vperm.xlu0 %46, %v22
    %v48 = vpop.permute.xlu0 %47
    %51 = vset.pattern.permute.xlu0 0
    %52 = vperm.xlu0 %51, %v23
    %v53 = vpop.permute.xlu0 %52
    %v56 = vperm.slane %v19, 0
    %v57 = vperm.slane %v19, 1
    %v60 = vmul.f32 %v48, %v56
    %v61 = vmul.f32 %v48, %v57
    %v62 = vmul.f32 %v53, %v56
    %v63 = vmul.f32 %v53, %v57
    %v64 = vadd.f32 %v41, %v60
    %v65 = vadd.f32 %v42, %v61
    %v66 = vadd.f32 %v43, %v62
    %v67 = vadd.f32 %v44, %v63
    %69 = vset.pattern.permute.xlu0 0
    %70 = vperm.xlu0 %69, %v24
    %v71 = vpop.permute.xlu0 %70
    %74 = vset.pattern.permute.xlu0 0
    %75 = vperm.xlu0 %74, %v25
    %v76 = vpop.permute.xlu0 %75
    %v78 = vadd.f32 %v64, %v71
    %v79 = vadd.f32 %v65, %v71
    %v80 = vadd.f32 %v66, %v76
    %v81 = vadd.f32 %v67, %v76
    %v82 = vtanh.pop %v78
    %v83 = vtanh.pop %v79
    %v84 = vtanh.pop %v80
    %v85 = vtanh.pop %v81
    %v86 = vld [vmem:[%s2] sm:$0xff]
    %v87 = vld [vmem:[%s2 + $0x20] sm:$0xff]
    %v88 = vld [vmem:[%s2 + $0x40] sm:$0xff]
    %v89 = vld [vmem:[%s2 + $0x60] sm:$0xff]
    %v90 = vld [vmem:[%s2 + $0x80] sm:$0xff]
    %v91 = vld [vmem:[%s2 + $0xa0] sm:$0xff]
    %v92 = vld [vmem:[%s2 + $0xc0] sm:$0x3]
    %v93 = vld [vmem:[%s3 + $0x30] sm:$0xff]
    %v94 = vld [vmem:[%s3 + $0x38] sm:$0xff]
    %v95 = vld [vmem:[%s3 + $0x40] sm:$0xff]
    %v96 = vld [vmem:[%s3 + $0x48] sm:$0xff]
    %v97 = vld [vmem:[%s3 + $0x50] sm:$0xff]
    %v98 = vld [vmem:[%s3 + $0x58] sm:$0xff]
    %v99 = vld [vmem:[%s3 + $0x60] sm:$0x3]
    %101 = vset.pattern.permute.xlu0 0
    %102 = vperm.xlu0 %101, %v93
    %v103 = vpop.permute.xlu0 %102
    %106 = vset.pattern.permute.xlu0 0
    %107 = vperm.xlu0 %106, %v94
    %v108 = vpop.permute.xlu0 %107
    %111 = vset.pattern.permute.xlu0 0
    %112 = vperm.xlu0 %111, %v95
    %v113 = vpop.permute.xlu0 %112
    %116 = vset.pattern.permute.xlu0 0
    %117 = vperm.xlu0 %116, %v96
    %v118 = vpop.permute.xlu0 %117
    %121 = vset.pattern.permute.xlu0 0
    %122 = vperm.xlu0 %121, %v97
    %v123 = vpop.permute.xlu0 %122
    %126 = vset.pattern.permute.xlu0 0
    %127 = vperm.xlu0 %126, %v98
    %v128 = vpop.permute.xlu0 %127
    %131 = vset.pattern.permute.xlu0 0
    %132 = vperm.xlu0 %131, %v99
    %v133 = vpop.permute.xlu0 %132
    %vm135 = vcmask 80896
    %v137 = vsel %vm135, %v86, 0
    %v140 = vsel %vm135, %v87, 0
    %v143 = vsel %vm135, %v88, 0
    %v146 = vsel %vm135, %v89, 0
    %v149 = vsel %vm135, %v90, 0
    %v152 = vsel %vm135, %v91, 0
    %v155 = vsel %vm135, %v92, 0
    %vm157 = vcmask 1041408
    %v159 = vsel %vm157, %v84, 0
    %v162 = vsel %vm157, %v85, 0
    %164 = vmatpush.msra.mxu0 0.0
    %165 = vmatpush.msra.mxu0 0.0
    %166 = vmatpush.msra.mxu0 0.0
    %167 = vmatpush.msra.mxu0 0.0
    %168 = vmatpush.msra.mxu0 0.0
    %169 = vmatpush.msra.mxu0 0.0
    %170 = vmatpush.msra.mxu0 0.0
    %171 = vmatpush.msra.mxu0 0.0
    %172 = vmatpush.msra.mxu0 0.0
    %173 = vmatpush.msra.mxu0 0.0
    %174 = vmatpush.msra.mxu0 0.0
    %175 = vmatpush.msra.mxu0 0.0
    %176 = vmatpush.msra.mxu0 0.0
    %177 = vmatpush.msra.mxu0 0.0
    %178 = vmatpush.msra.mxu0 %v159
    %179 = vmatpush.msra.mxu0 %v82
    %180 = vmatmul.f32.gmra.mxu0 %v137
    %v181 = vpop.f32.mrf.mxu0
    %v182 = vadd.f32 %v103, %v181
    %183 = vmatmul.f32.gmra.mxu0 %v140
    %v184 = vpop.f32.mrf.mxu0
    %v185 = vadd.f32 %v108, %v184
    %186 = vmatmul.f32.gmra.mxu0 %v143
    %v187 = vpop.f32.mrf.mxu0
    %v188 = vadd.f32 %v113, %v187
    %189 = vmatmul.f32.gmra.mxu0 %v146
    %v190 = vpop.f32.mrf.mxu0
    %v191 = vadd.f32 %v118, %v190
    %192 = vmatmul.f32.gmra.mxu0 %v149
    %v193 = vpop.f32.mrf.mxu0
    %v194 = vadd.f32 %v123, %v193
    %195 = vmatmul.f32.gmra.mxu0 %v152
    %v196 = vpop.f32.mrf.mxu0
    %v197 = vadd.f32 %v128, %v196
    %198 = vmatmul.f32.gmra.mxu0 %v155
    %v199 = vpop.f32.mrf.mxu0
    %v200 = vadd.f32 %v133, %v199
    %201 = vdwg.mxu0
    %202 = vmatpush.msra.mxu0 0.0
    %203 = vmatpush.msra.mxu0 0.0
    %204 = vmatpush.msra.mxu0 0.0
    %205 = vmatpush.msra.mxu0 0.0
    %206 = vmatpush.msra.mxu0 0.0
    %207 = vmatpush.msra.mxu0 0.0
    %208 = vmatpush.msra.mxu0 0.0
    %209 = vmatpush.msra.mxu0 0.0
    %210 = vmatpush.msra.mxu0 0.0
    %211 = vmatpush.msra.mxu0 0.0
    %212 = vmatpush.msra.mxu0 0.0
    %213 = vmatpush.msra.mxu0 0.0
    %214 = vmatpush.msra.mxu0 0.0
    %215 = vmatpush.msra.mxu0 0.0
    %216 = vmatpush.msra.mxu0 %v162
    %217 = vmatpush.msra.mxu0 %v83
    %218 = vmatmul.f32.gmra.mxu0 %v137
    %v219 = vpop.f32.mrf.mxu0
    %v220 = vadd.f32 %v103, %v219
    %221 = vmatmul.f32.gmra.mxu0 %v140
    %v222 = vpop.f32.mrf.mxu0
    %v223 = vadd.f32 %v108, %v222
    %224 = vmatmul.f32.gmra.mxu0 %v143
    %v225 = vpop.f32.mrf.mxu0
    %v226 = vadd.f32 %v113, %v225
    %227 = vmatmul.f32.gmra.mxu0 %v146
    %v228 = vpop.f32.mrf.mxu0
    %v229 = vadd.f32 %v118, %v228
    %230 = vmatmul.f32.gmra.mxu0 %v149
    %v231 = vpop.f32.mrf.mxu0
    %v232 = vadd.f32 %v123, %v231
    %233 = vmatmul.f32.gmra.mxu0 %v152
    %v234 = vpop.f32.mrf.mxu0
    %v235 = vadd.f32 %v128, %v234
    %236 = vmatmul.f32.gmra.mxu0 %v155
    %v237 = vpop.f32.mrf.mxu0
    %v238 = vadd.f32 %v133, %v237
    %239 = vdwg.mxu0
    %v240 = vtanh.pop %v182
    %v241 = vtanh.pop %v220
    %v242 = vtanh.pop %v185
    %v243 = vtanh.pop %v223
    %v244 = vtanh.pop %v188
    %v245 = vtanh.pop %v226
    %v246 = vtanh.pop %v191
    %v247 = vtanh.pop %v229
    %v248 = vtanh.pop %v194
    %v249 = vtanh.pop %v232
    %v250 = vtanh.pop %v197
    %v251 = vtanh.pop %v235
    %v252 = vtanh.pop %v200
    %v253 = vtanh.pop %v238
    %v254 = vld [vmem:[%s2 + $0x8] sm:$0xff]
    %v255 = vld [vmem:[%s2 + $0x28] sm:$0xff]
    %v256 = vld [vmem:[%s2 + $0x48] sm:$0xff]
    %v257 = vld [vmem:[%s2 + $0x68] sm:$0xff]
    %v258 = vld [vmem:[%s2 + $0x88] sm:$0xff]
    %v259 = vld [vmem:[%s2 + $0xa8] sm:$0xff]
    %v260 = vld [vmem:[%s2 + $0xc8] sm:$0x3]
    %v261 = vld [vmem:[%s3 + $0x68] sm:$0xff]
    %v262 = vld [vmem:[%s3 + $0x70] sm:$0xff]
    %v263 = vld [vmem:[%s3 + $0x78] sm:$0xff]
    %v264 = vld [vmem:[%s3 + $0x80] sm:$0xff]
    %v265 = vld [vmem:[%s3 + $0x88] sm:$0xff]
    %v266 = vld [vmem:[%s3 + $0x90] sm:$0xff]
    %v267 = vld [vmem:[%s3 + $0x98] sm:$0x3]
    %269 = vset.pattern.permute.xlu0 0
    %270 = vperm.xlu0 %269, %v261
    %v271 = vpop.permute.xlu0 %270
    %274 = vset.pattern.permute.xlu0 0
    %275 = vperm.xlu0 %274, %v262
    %v276 = vpop.permute.xlu0 %275
    %279 = vset.pattern.permute.xlu0 0
    %280 = vperm.xlu0 %279, %v263
    %v281 = vpop.permute.xlu0 %280
    %284 = vset.pattern.permute.xlu0 0
    %285 = vperm.xlu0 %284, %v264
    %v286 = vpop.permute.xlu0 %285
    %289 = vset.pattern.permute.xlu0 0
    %290 = vperm.xlu0 %289, %v265
    %v291 = vpop.permute.xlu0 %290
    %294 = vset.pattern.permute.xlu0 0
    %295 = vperm.xlu0 %294, %v266
    %v296 = vpop.permute.xlu0 %295
    %299 = vset.pattern.permute.xlu0 0
    %300 = vperm.xlu0 %299, %v267
    %v301 = vpop.permute.xlu0 %300
    %vm303 = vcmask 408576
    %v305 = vsel %vm303, %v254, 0
    %v308 = vsel %vm303, %v255, 0
    %v311 = vsel %vm303, %v256, 0
    %v314 = vsel %vm303, %v257, 0
    %v317 = vsel %vm303, %v258, 0
    %v320 = vsel %vm303, %v259, 0
    %v323 = vsel %vm303, %v260, 0
    %v326 = vsel %vm157, %v252, 0
    %v329 = vsel %vm157, %v253, 0
    %331 = vmatpush.msra.mxu0 0.0
    %332 = vmatpush.msra.mxu0 0.0
    %333 = vmatpush.msra.mxu0 0.0
    %334 = vmatpush.msra.mxu0 0.0
    %335 = vmatpush.msra.mxu0 0.0
    %336 = vmatpush.msra.mxu0 0.0
    %337 = vmatpush.msra.mxu0 0.0
    %338 = vmatpush.msra.mxu0 0.0
    %339 = vmatpush.msra.mxu0 0.0
    %340 = vmatpush.msra.mxu0 %v326
    %341 = vmatpush.msra.mxu0 %v250
    %342 = vmatpush.msra.mxu0 %v248
    %343 = vmatpush.msra.mxu0 %v246
    %344 = vmatpush.msra.mxu0 %v244
    %345 = vmatpush.msra.mxu0 %v242
    %346 = vmatpush.msra.mxu0 %v240
    %347 = vmatmul.f32.gmra.mxu0 %v305
    %v348 = vpop.f32.mrf.mxu0
    %v349 = vadd.f32 %v271, %v348
    %350 = vmatmul.f32.gmra.mxu0 %v308
    %v351 = vpop.f32.mrf.mxu0
    %v352 = vadd.f32 %v276, %v351
    %353 = vmatmul.f32.gmra.mxu0 %v311
    %v354 = vpop.f32.mrf.mxu0
    %v355 = vadd.f32 %v281, %v354
    %356 = vmatmul.f32.gmra.mxu0 %v314
    %v357 = vpop.f32.mrf.mxu0
    %v358 = vadd.f32 %v286, %v357
    %359 = vmatmul.f32.gmra.mxu0 %v317
    %v360 = vpop.f32.mrf.mxu0
    %v361 = vadd.f32 %v291, %v360
    %362 = vmatmul.f32.gmra.mxu0 %v320
    %v363 = vpop.f32.mrf.mxu0
    %v364 = vadd.f32 %v296, %v363
    %365 = vmatmul.f32.gmra.mxu0 %v323
    %v366 = vpop.f32.mrf.mxu0
    %v367 = vadd.f32 %v301, %v366
    %368 = vdwg.mxu0
    %369 = vmatpush.msra.mxu0 0.0
    %370 = vmatpush.msra.mxu0 0.0
    %371 = vmatpush.msra.mxu0 0.0
    %372 = vmatpush.msra.mxu0 0.0
    %373 = vmatpush.msra.mxu0 0.0
    %374 = vmatpush.msra.mxu0 0.0
    %375 = vmatpush.msra.mxu0 0.0
    %376 = vmatpush.msra.mxu0 0.0
    %377 = vmatpush.msra.mxu0 0.0
    %378 = vmatpush.msra.mxu0 %v329
    %379 = vmatpush.msra.mxu0 %v251
    %380 = vmatpush.msra.mxu0 %v249
    %381 = vmatpush.msra.mxu0 %v247
    %382 = vmatpush.msra.mxu0 %v245
    %383 = vmatpush.msra.mxu0 %v243
    %384 = vmatpush.msra.mxu0 %v241
    %385 = vmatmul.f32.gmra.mxu0 %v305
    %v386 = vpop.f32.mrf.mxu0
    %v387 = vadd.f32 %v271, %v386
    %388 = vmatmul.f32.gmra.mxu0 %v308
    %v389 = vpop.f32.mrf.mxu0
    %v390 = vadd.f32 %v276, %v389
    %391 = vmatmul.f32.gmra.mxu0 %v311
    %v392 = vpop.f32.mrf.mxu0
    %v393 = vadd.f32 %v281, %v392
    %394 = vmatmul.f32.gmra.mxu0 %v314
    %v395 = vpop.f32.mrf.mxu0
    %v396 = vadd.f32 %v286, %v395
    %397 = vmatmul.f32.gmra.mxu0 %v317
    %v398 = vpop.f32.mrf.mxu0
    %v399 = vadd.f32 %v291, %v398
    %400 = vmatmul.f32.gmra.mxu0 %v320
    %v401 = vpop.f32.mrf.mxu0
    %v402 = vadd.f32 %v296, %v401
    %403 = vmatmul.f32.gmra.mxu0 %v323
    %v404 = vpop.f32.mrf.mxu0
    %v405 = vadd.f32 %v301, %v404
    %406 = vdwg.mxu0
    %v407 = vtanh.pop %v349
    %v408 = vtanh.pop %v387
    %v409 = vtanh.pop %v352
    %v410 = vtanh.pop %v390
    %v411 = vtanh.pop %v355
    %v412 = vtanh.pop %v393
    %v413 = vtanh.pop %v358
    %v414 = vtanh.pop %v396
    %v415 = vtanh.pop %v361
    %v416 = vtanh.pop %v399
    %v417 = vtanh.pop %v364
    %v418 = vtanh.pop %v402
    %v419 = vtanh.pop %v367
    %v420 = vtanh.pop %v405
    %v421 = vld [vmem:[%s2 + $0x10] sm:$0xff]
    %v422 = vld [vmem:[%s2 + $0x30] sm:$0xff]
    %v423 = vld [vmem:[%s2 + $0x50] sm:$0xff]
    %v424 = vld [vmem:[%s2 + $0x70] sm:$0xff]
    %v425 = vld [vmem:[%s2 + $0x90] sm:$0xff]
    %v426 = vld [vmem:[%s2 + $0xb0] sm:$0xff]
    %v427 = vld [vmem:[%s2 + $0xd0] sm:$0x3]
    %v428 = vld [vmem:[%s3 + $0xa0] sm:$0xff]
    %v429 = vld [vmem:[%s3 + $0xa8] sm:$0xff]
    %v430 = vld [vmem:[%s3 + $0xb0] sm:$0xff]
    %v431 = vld [vmem:[%s3 + $0xb8] sm:$0xff]
    %v432 = vld [vmem:[%s3 + $0xc0] sm:$0xff]
    %v433 = vld [vmem:[%s3 + $0xc8] sm:$0xff]
    %v434 = vld [vmem:[%s3 + $0xd0] sm:$0x3]
    %436 = vset.pattern.permute.xlu0 0
    %437 = vperm.xlu0 %436, %v428
    %v438 = vpop.permute.xlu0 %437
    %441 = vset.pattern.permute.xlu0 0
    %442 = vperm.xlu0 %441, %v429
    %v443 = vpop.permute.xlu0 %442
    %446 = vset.pattern.permute.xlu0 0
    %447 = vperm.xlu0 %446, %v430
    %v448 = vpop.permute.xlu0 %447
    %451 = vset.pattern.permute.xlu0 0
    %452 = vperm.xlu0 %451, %v431
    %v453 = vpop.permute.xlu0 %452
    %456 = vset.pattern.permute.xlu0 0
    %457 = vperm.xlu0 %456, %v432
    %v458 = vpop.permute.xlu0 %457
    %461 = vset.pattern.permute.xlu0 0
    %462 = vperm.xlu0 %461, %v433
    %v463 = vpop.permute.xlu0 %462
    %466 = vset.pattern.permute.xlu0 0
    %467 = vperm.xlu0 %466, %v434
    %v468 = vpop.permute.xlu0 %467
    %v471 = vsel %vm303, %v421, 0
    %v474 = vsel %vm303, %v422, 0
    %v477 = vsel %vm303, %v423, 0
    %v480 = vsel %vm303, %v424, 0
    %v483 = vsel %vm303, %v425, 0
    %v486 = vsel %vm303, %v426, 0
    %v489 = vsel %vm303, %v427, 0
    %v492 = vsel %vm157, %v419, 0
    %v495 = vsel %vm157, %v420, 0
    %497 = vmatpush.msra.mxu0 0.0
    %498 = vmatpush.msra.mxu0 0.0
    %499 = vmatpush.msra.mxu0 0.0
    %500 = vmatpush.msra.mxu0 0.0
    %501 = vmatpush.msra.mxu0 0.0
    %502 = vmatpush.msra.mxu0 0.0
    %503 = vmatpush.msra.mxu0 0.0
    %504 = vmatpush.msra.mxu0 0.0
    %505 = vmatpush.msra.mxu0 0.0
    %506 = vmatpush.msra.mxu0 %v492
    %507 = vmatpush.msra.mxu0 %v417
    %508 = vmatpush.msra.mxu0 %v415
    %509 = vmatpush.msra.mxu0 %v413
    %510 = vmatpush.msra.mxu0 %v411
    %511 = vmatpush.msra.mxu0 %v409
    %512 = vmatpush.msra.mxu0 %v407
    %513 = vmatmul.f32.gmra.mxu0 %v471
    %v514 = vpop.f32.mrf.mxu0
    %v515 = vadd.f32 %v438, %v514
    %516 = vmatmul.f32.gmra.mxu0 %v474
    %v517 = vpop.f32.mrf.mxu0
    %v518 = vadd.f32 %v443, %v517
    %519 = vmatmul.f32.gmra.mxu0 %v477
    %v520 = vpop.f32.mrf.mxu0
    %v521 = vadd.f32 %v448, %v520
    %522 = vmatmul.f32.gmra.mxu0 %v480
    %v523 = vpop.f32.mrf.mxu0
    %v524 = vadd.f32 %v453, %v523
    %525 = vmatmul.f32.gmra.mxu0 %v483
    %v526 = vpop.f32.mrf.mxu0
    %v527 = vadd.f32 %v458, %v526
    %528 = vmatmul.f32.gmra.mxu0 %v486
    %v529 = vpop.f32.mrf.mxu0
    %v530 = vadd.f32 %v463, %v529
    %531 = vmatmul.f32.gmra.mxu0 %v489
    %v532 = vpop.f32.mrf.mxu0
    %v533 = vadd.f32 %v468, %v532
    %534 = vdwg.mxu0
    %535 = vmatpush.msra.mxu0 0.0
    %536 = vmatpush.msra.mxu0 0.0
    %537 = vmatpush.msra.mxu0 0.0
    %538 = vmatpush.msra.mxu0 0.0
    %539 = vmatpush.msra.mxu0 0.0
    %540 = vmatpush.msra.mxu0 0.0
    %541 = vmatpush.msra.mxu0 0.0
    %542 = vmatpush.msra.mxu0 0.0
    %543 = vmatpush.msra.mxu0 0.0
    %544 = vmatpush.msra.mxu0 %v495
    %545 = vmatpush.msra.mxu0 %v418
    %546 = vmatpush.msra.mxu0 %v416
    %547 = vmatpush.msra.mxu0 %v414
    %548 = vmatpush.msra.mxu0 %v412
    %549 = vmatpush.msra.mxu0 %v410
    %550 = vmatpush.msra.mxu0 %v408
    %551 = vmatmul.f32.gmra.mxu0 %v471
    %v552 = vpop.f32.mrf.mxu0
    %v553 = vadd.f32 %v438, %v552
    %554 = vmatmul.f32.gmra.mxu0 %v474
    %v555 = vpop.f32.mrf.mxu0
    %v556 = vadd.f32 %v443, %v555
    %557 = vmatmul.f32.gmra.mxu0 %v477
    %v558 = vpop.f32.mrf.mxu0
    %v559 = vadd.f32 %v448, %v558
    %560 = vmatmul.f32.gmra.mxu0 %v480
    %v561 = vpop.f32.mrf.mxu0
    %v562 = vadd.f32 %v453, %v561
    %563 = vmatmul.f32.gmra.mxu0 %v483
    %v564 = vpop.f32.mrf.mxu0
    %v565 = vadd.f32 %v458, %v564
    %566 = vmatmul.f32.gmra.mxu0 %v486
    %v567 = vpop.f32.mrf.mxu0
    %v568 = vadd.f32 %v463, %v567
    %569 = vmatmul.f32.gmra.mxu0 %v489
    %v570 = vpop.f32.mrf.mxu0
    %v571 = vadd.f32 %v468, %v570
    %572 = vdwg.mxu0
    %v573 = vtanh.pop %v515
    %v574 = vtanh.pop %v553
    %v575 = vtanh.pop %v518
    %v576 = vtanh.pop %v556
    %v577 = vtanh.pop %v521
    %v578 = vtanh.pop %v559
    %v579 = vtanh.pop %v524
    %v580 = vtanh.pop %v562
    %v581 = vtanh.pop %v527
    %v582 = vtanh.pop %v565
    %v583 = vtanh.pop %v530
    %v584 = vtanh.pop %v568
    %v585 = vtanh.pop %v533
    %v586 = vtanh.pop %v571
    %v587 = vld [vmem:[%s2 + $0x18] sm:$0xff]
    %v588 = vld [vmem:[%s2 + $0x38] sm:$0x3]
    %v589 = vld [vmem:[%s3 + $0xd8] sm:$0xff]
    %v590 = vld [vmem:[%s3 + $0xe0] sm:$0x3]
    %592 = vset.pattern.permute.xlu0 0
    %593 = vperm.xlu0 %592, %v589
    %v594 = vpop.permute.xlu0 %593
    %597 = vset.pattern.permute.xlu0 0
    %598 = vperm.xlu0 %597, %v590
    %v599 = vpop.permute.xlu0 %598
    %v602 = vsel %vm303, %v587, 0
    %v605 = vsel %vm303, %v588, 0
    %v608 = vsel %vm157, %v585, 0
    %v611 = vsel %vm157, %v586, 0
    %613 = vmatpush.msra.mxu0 0.0
    %614 = vmatpush.msra.mxu0 0.0
    %615 = vmatpush.msra.mxu0 0.0
    %616 = vmatpush.msra.mxu0 0.0
    %617 = vmatpush.msra.mxu0 0.0
    %618 = vmatpush.msra.mxu0 0.0
    %619 = vmatpush.msra.mxu0 0.0
    %620 = vmatpush.msra.mxu0 0.0
    %621 = vmatpush.msra.mxu0 0.0
    %622 = vmatpush.msra.mxu0 %v608
    %623 = vmatpush.msra.mxu0 %v583
    %624 = vmatpush.msra.mxu0 %v581
    %625 = vmatpush.msra.mxu0 %v579
    %626 = vmatpush.msra.mxu0 %v577
    %627 = vmatpush.msra.mxu0 %v575
    %628 = vmatpush.msra.mxu0 %v573
    %629 = vmatmul.f32.gmra.mxu0 %v602
    %v630 = vpop.f32.mrf.mxu0
    %v631 = vadd.f32 %v594, %v630
    %632 = vmatmul.f32.gmra.mxu0 %v605
    %v633 = vpop.f32.mrf.mxu0
    %v634 = vadd.f32 %v599, %v633
    %635 = vdwg.mxu0
    %636 = vmatpush.msra.mxu0 0.0
    %637 = vmatpush.msra.mxu0 0.0
    %638 = vmatpush.msra.mxu0 0.0
    %639 = vmatpush.msra.mxu0 0.0
    %640 = vmatpush.msra.mxu0 0.0
    %641 = vmatpush.msra.mxu0 0.0
    %642 = vmatpush.msra.mxu0 0.0
    %643 = vmatpush.msra.mxu0 0.0
    %644 = vmatpush.msra.mxu0 0.0
    %645 = vmatpush.msra.mxu0 %v611
    %646 = vmatpush.msra.mxu0 %v584
    %647 = vmatpush.msra.mxu0 %v582
    %648 = vmatpush.msra.mxu0 %v580
    %649 = vmatpush.msra.mxu0 %v578
    %650 = vmatpush.msra.mxu0 %v576
    %651 = vmatpush.msra.mxu0 %v574
    %652 = vmatmul.f32.gmra.mxu0 %v602
    %v653 = vpop.f32.mrf.mxu0
    %v654 = vadd.f32 %v594, %v653
    %655 = vmatmul.f32.gmra.mxu0 %v605
    %v656 = vpop.f32.mrf.mxu0
    %v657 = vadd.f32 %v599, %v656
    %658 = vdwg.mxu0
    %v659 = vtanh.pop %v631
    %v660 = vtanh.pop %v654
    %v661 = vtanh.pop %v634
    %v662 = vtanh.pop %v657
    %v663 = vld [vmem:[%s3 + $0xe8] sm:$0xff]
    %v664 = vld [vmem:[%s3 + $0xf0] sm:$0x3]
    %v665 = vld [vmem:[%s3 + $0xf8] sm:$0x1]
    %667 = vset.pattern.permute.xlu0 0
    %668 = vperm.xlu0 %667, %v663
    %v669 = vpop.permute.xlu0 %668
    %672 = vset.pattern.permute.xlu0 0
    %673 = vperm.xlu0 %672, %v664
    %v674 = vpop.permute.xlu0 %673
    %v676 = vmul.f32 %v669, %v659
    %v677 = vmul.f32 %v669, %v660
    %v678 = vmul.f32 %v674, %v661
    %v679 = vmul.f32 %v674, %v662
    %v680 = vsel %vm157, %v678, 0.0
    %v681 = vadd.f32 %v676, %v680
    %v682 = vrot.slane %v681, 4
    %v683 = vadd.f32 %v681, %v682
    %v684 = vrot.slane %v683, 2
    %v685 = vadd.f32 %v683, %v684
    %v686 = vrot.slane %v685, 1
    %v687 = vadd.f32 %v685, %v686
    %v688 = vsel %vm157, %v679, 0.0
    %v689 = vadd.f32 %v677, %v688
    %v690 = vrot.slane %v689, 4
    %v691 = vadd.f32 %v689, %v690
    %v692 = vrot.slane %v691, 2
    %v693 = vadd.f32 %v691, %v692
    %v694 = vrot.slane %v693, 1
    %v695 = vadd.f32 %v693, %v694
    %697 = vset.pattern.permute.xlu0 0
    %698 = vperm.xlu0 %697, %v665
    %v699 = vpop.permute.xlu0 %698
    %v701 = vadd.f32 %v687, %v699
    %v702 = vadd.f32 %v695, %v699
    %v705 = vrot.slane %v702, 7
    %vm706 = vcmask 1040384
    %v707 = vsel %vm706, %v701, %v705
    %v709 = vlaneseq
    %vm710 = vcmp.ge.s32.totalorder %v709, 0
    %vm711 = vcmp.lt.s32.totalorder %v709, 256
    %vm712 = vmand %vm710, %vm711
    %713 = vst.msk [vmem:[#allocation2] sm:$0x3] %vm712, %v707
    // Predicated region
    $region18: #{tpu_custom_call.1} parent=1 // pred_check
      _
    $region19: #{tpu_custom_call.1} parent=1 // pred_check_branch
      %715 = sbr.rel (0) target = $region21
    $region20: #{tpu_custom_call.1} parent=1 // pred_region
      %717 = vsyncadd [#allocation3], 0
      %s719 = sshll.u32 [#allocation2], 4
      %s720 = int_to_ptr.vmem [resolvable:$true] %s719
      %s721 = sshll.u32 %s4, 4
      %s722 = int_to_ptr.hbm [resolvable:$true] %s721
      %724 = dma.vmem_to_hbm [thread:$0]  %s720, 32, %s722, [#allocation3]
    $region21: #{tpu_custom_call.1} parent=1 // pred_fallthru
      _
    // Predicated region
    $region22: #{tpu_custom_call.1} parent=1 // pred_check
      _
    $region23: #{tpu_custom_call.1} parent=1 // pred_check_branch
      %726 = sbr.rel (0) target = $region25
    $region24: #{tpu_custom_call.1} parent=1 // pred_region
      %728 = dma.done [#allocation3], 32
    $region25: #{tpu_custom_call.1} parent=1 // pred_fallthru
      _
    %729 = vsyncpa [#allocation3], 1

</llo_original>
